<compile_context>
chip_gen: v7x
topology: tpu7x:2x2x1
jax: 0.10.0
libtpu: 0.0.40
codegen_flags: <defaults>
</compile_context>

<pallas_src>
import jax
import jax.numpy as jnp
import numpy as np
from jax.experimental import pallas as pl
from jax.experimental.pallas import tpu as pltpu

LANE = 128
SMOOTH = 1e-5


def _make_dice_partial_kernel(n_classes, hw_valid, tile, fuse_softmax, needs_mask):
    def kernel(x_ref, t_ref, out_ref):
        # x_ref  : (C, TILE) scores for one spatial tile (native dtype)
        # t_ref  : (1, TILE) int32 labels
        # out_ref: (C, 2) f32 partial sums [intersect, sum((x - onehot)^2)]
        x = x_ref[...].astype(jnp.float32)                       # (C, TILE)
        labels = t_ref[...]                                      # (1, TILE)

        if fuse_softmax:
            # Fused softmax over the class (sublane) axis: avoids an extra
            # full HBM read+write pass in the wrapper.
            x = jax.nn.softmax(x, axis=0)

        cls = jax.lax.broadcasted_iota(jnp.int32, (n_classes, tile), 0)
        onehot = (cls == labels).astype(jnp.float32)             # (C, TILE)

        if needs_mask:
            s = pl.program_id(1)
            pos = s * tile + jax.lax.broadcasted_iota(jnp.int32, (1, tile), 1)
            valid = pos < hw_valid                               # (1, TILE)
            x = jnp.where(valid, x, 0.0)
            onehot = jnp.where(valid, onehot, 0.0)

        inter = jnp.sum(x * onehot, axis=-1, keepdims=True)      # (C, 1)
        diff = x - onehot
        dsum = jnp.sum(diff * diff, axis=-1, keepdims=True)      # (C, 1)

        out_ref[:, 0:1] = inter
        out_ref[:, 1:2] = dsum

    return kernel


def dice_loss_pallas(inputs, target, n_classes, weight=None, softmax=False):
    """Pallas implementation of DiceLoss.forward (returns a scalar f32)."""
    B, C, H, W = inputs.shape
    assert C == n_classes, "channel dim must equal n_classes"
    HW = H * W

    # Free, contiguous reshapes -- no transpose, no dtype change in HBM.
    x = inputs.reshape(B, C, HW)
    t = target.reshape(B, 1, HW).astype(jnp.int32)

    # Tiny-image fallback: keep the lane dim at least one full vreg wide.
    hw_padded = HW
    if HW < LANE:
        pad = LANE - HW
        x = jnp.pad(x, ((0, 0), (0, 0), (0, pad)))
        t = jnp.pad(t, ((0, 0), (0, 0), (0, pad)), constant_values=n_classes)
        hw_padded = LANE

    # Spatial tile (lanes): multiple of 128, sized so double-buffered score +
    # label blocks stay around ~16 MiB total on every TPU generation.
    itemsize = jnp.dtype(x.dtype).itemsize
    per_lane_bytes = C * itemsize + 4                  # scores + int32 label
    tile = (8 * 1024 * 1024) // per_lane_bytes         # per-buffer budget
    tile = (tile // LANE) * LANE
    tile = min(tile, 2048 * LANE)                      # sublane cap
    tile = min(tile, (hw_padded // LANE) * LANE)       # don't exceed the data
    tile = max(tile, LANE)
    n_tiles = pl.cdiv(hw_padded, tile)
    needs_mask = (HW % tile) != 0 or hw_padded != HW

    kernel = _make_dice_partial_kernel(n_classes, HW, tile, softmax, needs_mask)

    partials = pl.pallas_call(
        kernel,
        out_shape=jax.ShapeDtypeStruct((B, n_tiles, n_classes, 2), jnp.float32),
        grid=(B, n_tiles),
        in_specs=[
            pl.BlockSpec((None, C, tile), lambda b, s: (b, 0, s)),
            pl.BlockSpec((None, 1, tile), lambda b, s: (b, 0, s)),
        ],
        out_specs=pl.BlockSpec(
            (None, None, n_classes, 2), lambda b, s: (b, s, 0, 0)),
        compiler_params=pltpu.CompilerParams(
            dimension_semantics=("parallel", "parallel"),
            vmem_limit_bytes=32 * 1024 * 1024,
        ),
    )(x, t)

    # Finalize on the tiny reduction: dice_c = 1 - (2 I + s) / (D + 2 I + s).
    sums = jnp.sum(partials, axis=(0, 1))              # (C, 2)
    inter = sums[:, 0]
    dsum = sums[:, 1]
    dice = 1.0 - (2.0 * inter + SMOOTH) / (dsum + 2.0 * inter + SMOOTH)

    if weight is None:
        w = jnp.ones((n_classes,), jnp.float32)
    else:
        w = jnp.asarray(weight, jnp.float32)
    return jnp.sum(dice * w) / n_classes


def dice_loss_ref(inputs, target, n_classes, weight=None, softmax=False):
    """Pure-JAX reference mirroring the PyTorch module."""
    if softmax:
        inputs = jax.nn.softmax(inputs, axis=1)
    tgt_1h = jax.nn.one_hot(target, n_classes, axis=1, dtype=jnp.float32)
    if weight is None:
        weight = [1.0] * n_classes
    loss = 0.0
    for i in range(n_classes):
        s = inputs[:, i].astype(jnp.float32)
        t = tgt_1h[:, i]
        intersect = jnp.sum(s * t)
        y_sum = jnp.sum(t * t)
        z_sum = jnp.sum(s * s)
        dice = 1.0 - (2.0 * intersect + SMOOTH) / (z_sum + y_sum + SMOOTH)
        loss = loss + dice * weight[i]
    return loss / n_classes


if __name__ == "__main__":
    B, C, H, W = 2, 4, 16, 16
    key = jax.random.PRNGKey(0)
    k_in, k_tg, k_in2, k_tg2 = jax.random.split(key, 4)

    logits = jax.random.normal(k_in, (B, C, H, W), dtype=jnp.float32)
    probs = jax.nn.softmax(logits, axis=1)          # pre-softmaxed scores
    target = jax.random.randint(k_tg, (B, H, W), 0, C, dtype=jnp.int32)

    # 1) probabilities in, softmax=False
    loss = jax.block_until_ready(dice_loss_pallas(probs, target, n_classes=C))
    ref = jax.block_until_ready(dice_loss_ref(probs, target, n_classes=C))
    assert np.allclose(np.asarray(loss), np.asarray(ref), rtol=1e-4, atol=1e-5), (
        float(loss), float(ref))

    # 2) logits in, softmax=True (softmax fused into the kernel)
    loss_sm = jax.block_until_ready(
        dice_loss_pallas(logits, target, n_classes=C, softmax=True))
    ref_sm = jax.block_until_ready(
        dice_loss_ref(logits, target, n_classes=C, softmax=True))
    assert np.allclose(np.asarray(loss_sm), np.asarray(ref_sm), rtol=1e-4, atol=1e-5), (
        float(loss_sm), float(ref_sm))

    # 3) ragged spatial size (H*W not a multiple of 128) + class weights
    H2, W2 = 13, 13
    logits2 = jax.random.normal(k_in2, (1, C, H2, W2), dtype=jnp.float32)
    target2 = jax.random.randint(k_tg2, (1, H2, W2), 0, C, dtype=jnp.int32)
    wts = [0.5, 1.0, 2.0, 1.5]
    loss_r = jax.block_until_ready(
        dice_loss_pallas(logits2, target2, n_classes=C, weight=wts, softmax=True))
    ref_r = jax.block_until_ready(
        dice_loss_ref(logits2, target2, n_classes=C, weight=wts, softmax=True))
    assert np.allclose(np.asarray(loss_r), np.asarray(ref_r), rtol=1e-4, atol=1e-5), (
        float(loss_r), float(ref_r))

    print("KERNEL_OK")
</pallas_src>

<mosaic_0001>
module attributes {stable_mosaic.version = 11 : i64} {
  func.func @kernel(%arg0: i32, %arg1: i32, %arg2: memref<1x4x256xf32, #tpu.memory_space<vmem>>, %arg3: memref<1x1x256xi32, #tpu.memory_space<vmem>>, %arg4: memref<1x1x4x2xf32, #tpu.memory_space<vmem>>) attributes {dimension_semantics = [#tpu.dimension_semantics<parallel>, #tpu.dimension_semantics<parallel>], iteration_bounds = array<i64: 2, 1>, scalar_prefetch = 0 : i64, scratch_operands = 0 : i64, tpu.core_type = #tpu.core_type<tc>, window_params = [{transform_indices = @transform_0, window_bounds = array<i64: 1, 4, 256>}, {transform_indices = @transform_1, window_bounds = array<i64: 1, 1, 256>}, {transform_indices = @transform_2, window_bounds = array<i64: 1, 1, 4, 2>}]} {
    %c0 = arith.constant 0 : index
    %c0_0 = arith.constant 0 : index
    %c0_1 = arith.constant 0 : index
    %0 = vector.load %arg2[%c0, %c0_0, %c0_1] : memref<1x4x256xf32, #tpu.memory_space<vmem>>, vector<1x4x256xf32>
    %1 = vector.shape_cast %0 : vector<1x4x256xf32> to vector<4x256xf32>
    %c0_2 = arith.constant 0 : index
    %c0_3 = arith.constant 0 : index
    %c0_4 = arith.constant 0 : index
    %2 = vector.load %arg3[%c0_2, %c0_3, %c0_4] : memref<1x1x256xi32, #tpu.memory_space<vmem>>, vector<1x1x256xi32>
    %3 = vector.shape_cast %2 : vector<1x1x256xi32> to vector<1x256xi32>
    %4 = tpu.iota {dimensions = array<i32: 0>} : vector<4x256xi32>
    %5 = vector.broadcast %3 : vector<1x256xi32> to vector<4x256xi32>
    %6 = arith.cmpi eq, %4, %5 : vector<4x256xi32>
    %7 = arith.extui %6 : vector<4x256xi1> to vector<4x256xi32>
    %8 = arith.sitofp %7 : vector<4x256xi32> to vector<4x256xf32>
    %9 = arith.mulf %1, %8 : vector<4x256xf32>
    %cst = arith.constant dense<0.000000e+00> : vector<4xf32>
    %10 = vector.multi_reduction <add>, %9, %cst [1] : vector<4x256xf32> to vector<4xf32>
    %11 = vector.shape_cast %10 : vector<4xf32> to vector<4x1xf32>
    %12 = arith.subf %1, %8 : vector<4x256xf32>
    %13 = arith.mulf %12, %12 : vector<4x256xf32>
    %cst_5 = arith.constant dense<0.000000e+00> : vector<4xf32>
    %14 = vector.multi_reduction <add>, %13, %cst_5 [1] : vector<4x256xf32> to vector<4xf32>
    %15 = vector.shape_cast %14 : vector<4xf32> to vector<4x1xf32>
    %c0_6 = arith.constant 0 : index
    %c0_7 = arith.constant 0 : index
    %c0_8 = arith.constant 0 : index
    %c0_9 = arith.constant 0 : index
    %16 = vector.load %arg4[%c0_6, %c0_7, %c0_8, %c0_9] : memref<1x1x4x2xf32, #tpu.memory_space<vmem>>, vector<1x1x4x1xf32>
    %17 = vector.shape_cast %16 : vector<1x1x4x1xf32> to vector<4x1xf32>
    %18 = vector.shape_cast %11 : vector<4x1xf32> to vector<1x1x4x1xf32>
    tpu.vector_store %arg4[%c0_6, %c0_7, %c0_8, %c0_9], %18 {strides = array<i32>} : memref<1x1x4x2xf32, #tpu.memory_space<vmem>>, vector<1x1x4x1xf32>,
    %c0_10 = arith.constant 0 : index
    %c0_11 = arith.constant 0 : index
    %c0_12 = arith.constant 0 : index
    %c1 = arith.constant 1 : index
    %19 = vector.load %arg4[%c0_10, %c0_11, %c0_12, %c1] : memref<1x1x4x2xf32, #tpu.memory_space<vmem>>, vector<1x1x4x1xf32>
    %20 = vector.shape_cast %19 : vector<1x1x4x1xf32> to vector<4x1xf32>
    %21 = vector.shape_cast %15 : vector<4x1xf32> to vector<1x1x4x1xf32>
    tpu.vector_store %arg4[%c0_10, %c0_11, %c0_12, %c1], %21 {strides = array<i32>} : memref<1x1x4x2xf32, #tpu.memory_space<vmem>>, vector<1x1x4x1xf32>,
    return
  }
  func.func @transform_0(%arg0: i32, %arg1: i32) -> (i32, i32, i32) {
    %c0_i32 = arith.constant 0 : i32
    %c0_i32_0 = arith.constant 0 : i32
    return %arg0, %c0_i32, %arg1 : i32, i32, i32
  }
  func.func @transform_1(%arg0: i32, %arg1: i32) -> (i32, i32, i32) {
    %c0_i32 = arith.constant 0 : i32
    %c0_i32_0 = arith.constant 0 : i32
    return %arg0, %c0_i32, %arg1 : i32, i32, i32
  }
  func.func @transform_2(%arg0: i32, %arg1: i32) -> (i32, i32, i32, i32) {
    %c0_i32 = arith.constant 0 : i32
    %c0_i32_0 = arith.constant 0 : i32
    %c0_i32_1 = arith.constant 0 : i32
    return %arg0, %arg1, %c0_i32, %c0_i32_0 : i32, i32, i32, i32
  }
}

</mosaic_0001>

<llo_original>
// kernel: tpu_custom_call.1
$region0: #{tpu_custom_call.1}
  #allocation0 [shape = 'u32[]', space=smem, size = 0x4, offset = 0x4, fixed_abs, tag = 'smem constant byte address 0x4 - core index']
  #allocation1 [shape = 'u32[144,128]{1,0:T(1,128)}', space=vmem, size = 0x12000, scoped, tag = 'internal scratch']
  %s0 = inlined_call_operand.hbm [shape: f32[2,4,256], index: 0, kind: input, shape index: {}]
  %s1 = inlined_call_operand.hbm [shape: s32[2,1,256], index: 1, kind: input, shape index: {}]
  %s2 = inlined_call_operand.vmem [shape: f32[2,1,4,2], index: 2, kind: output, shape index: {}]
  %s3 = sld [smem:[#allocation0]]
  $region49: #{tpu_custom_call.1} parent=0
    _
  %s5 = ssub.s32 1, %s3
  %s6 = scalar_select 0, %s5, %s3
  $region1: #{tpu_custom_call.1} parent=0
    #allocation2 [shape = 'u8[8192]{0}', space=vmem, size = 0x2000, scoped, tag = 'input window, operand 0']
    #allocation3 [shape = 's32[2]{0}', space=sflag, size = 0x8, scoped, tag = 'scoped memory for tpu_custom_call.1']
    #allocation4 [shape = 'u8[2048]{0}', space=vmem, size = 0x800, scoped, tag = 'input window, operand 1']
    #allocation5 [shape = 's32[2]{0}', space=sflag, size = 0x8, scoped, tag = 'scoped memory for tpu_custom_call.1']
    %7 = vsyncpa [#allocation3], 0
    %s8 = scalar_lea.sflag [#allocation3], 1
    %9 = vsyncpa %s8, 0
    %10 = vsyncpa [#allocation5], 0
    %s11 = scalar_lea.sflag [#allocation5], 1
    %12 = vsyncpa %s11, 0
    loop: start=0, step=1, limit=4
    $region2: #{tpu_custom_call.1} parent=1 // loop_pre_header
      _
    $region3: #{tpu_custom_call.1} parent=1 // loop_header
      %s14 = sphi 0, %s18
      %p15 = scmp.ge.s32.totalorder %s14, 4
      %s21 = sphi 0, %s33
      %s22 = sphi 0, %s29
      %s23 = sphi 0, %s21
      %s24 = sphi 0, %s22
      %s25 = sphi 0, %s23
      %s26 = sphi 0, %s24
      %s38 = sphi 0, %s40
      %s41 = sphi 0, %s38
      %s42 = sphi 0, %s41
      %s58 = sphi 0, %s42
      %s66 = sphi 0, %s68
      %s69 = sphi 0, %s66
      %s70 = sphi 0, %s69
      %s86 = sphi 0, %s70
      %s94 = sphi 0, %s96
      %s97 = sphi 0, %s94
      %s98 = sphi 0, %s97
      %s114 = sphi 0, %s98
    $region4: #{tpu_custom_call.1} parent=1 // loop_header_branch
      %17 = sbr.rel (%p15) target = $region8
    $region5: #{tpu_custom_call.1} parent=1 // loop_body
      %s19 = ssub.s32 %s14, 1
      %s20 = ssub.s32 %s14, 2
      %s27 = sadd.s32 1, %s22
      %p28 = scmp.ge.s32.totalorder %s27, 1
      %s29 = scalar_select %p28, 0, %s27
      %s30 = sadd.s32 1, %s21
      %s31 = scalar_select %p28, %s30, %s21
      %p32 = scmp.ge.s32.totalorder %s31, 2
      %s33 = scalar_select %p32, 0, %s31
      %s34 = ssub.s32 %s21, %s33
      %s35 = ssub.s32 %s22, %s29
      %s36 = sor.u32 %s34, %s35
      %p37 = scmp.eq.s32.totalorder %s36, 0
      %s39 = sadd.s32 %s38, 1
      %s40 = scalar_select %p37, %s38, %s39
      %p43 = pneg %p37
      %p44 = scmp.eq.s32.totalorder %s14, 1
      %p45 = por %p43, %p44
      %p46 = scmp.ne.s32.totalorder %s38, %s41
      %p47 = scmp.eq.s32.totalorder %s14, 0
      %p48 = por %p46, %p47
      %p49 = scmp.ne.s32.totalorder %s38, %s41
      %p50 = scmp.eq.s32.totalorder %s19, 1
      %p51 = por %p49, %p50
      %p52 = scmp.ne.s32.totalorder %s41, %s42
      %p53 = scmp.eq.s32.totalorder %s19, 0
      %p54 = por %p52, %p53
      %p55 = scmp.ne.s32.totalorder %s41, %s42
      %p56 = scmp.eq.s32.totalorder %s20, 1
      %p57 = por %p55, %p56
      %p59 = scmp.ne.s32.totalorder %s42, %s58
      %p60 = scmp.eq.s32.totalorder %s20, 0
      %p61 = por %p59, %p60
      %s62 = ssub.s32 %s21, %s33
      %s63 = ssub.s32 %s22, %s29
      %s64 = sor.u32 %s62, %s63
      %p65 = scmp.eq.s32.totalorder %s64, 0
      %s67 = sadd.s32 %s66, 1
      %s68 = scalar_select %p65, %s66, %s67
      %p71 = pneg %p65
      %p72 = scmp.eq.s32.totalorder %s14, 1
      %p73 = por %p71, %p72
      %p74 = scmp.ne.s32.totalorder %s66, %s69
      %p75 = scmp.eq.s32.totalorder %s14, 0
      %p76 = por %p74, %p75
      %p77 = scmp.ne.s32.totalorder %s66, %s69
      %p78 = scmp.eq.s32.totalorder %s19, 1
      %p79 = por %p77, %p78
      %p80 = scmp.ne.s32.totalorder %s69, %s70
      %p81 = scmp.eq.s32.totalorder %s19, 0
      %p82 = por %p80, %p81
      %p83 = scmp.ne.s32.totalorder %s69, %s70
      %p84 = scmp.eq.s32.totalorder %s20, 1
      %p85 = por %p83, %p84
      %p87 = scmp.ne.s32.totalorder %s70, %s86
      %p88 = scmp.eq.s32.totalorder %s20, 0
      %p89 = por %p87, %p88
      %s90 = ssub.s32 %s21, %s33
      %s91 = ssub.s32 %s22, %s29
      %s92 = sor.u32 %s90, %s91
      %p93 = scmp.eq.s32.totalorder %s92, 0
      %s95 = sadd.s32 %s94, 1
      %s96 = scalar_select %p93, %s94, %s95
      %p99 = pneg %p93
      %p100 = scmp.eq.s32.totalorder %s14, 1
      %p101 = por %p99, %p100
      %p102 = scmp.ne.s32.totalorder %s94, %s97
      %p103 = scmp.eq.s32.totalorder %s14, 0
      %p104 = por %p102, %p103
      %p105 = scmp.ne.s32.totalorder %s94, %s97
      %p106 = scmp.eq.s32.totalorder %s19, 1
      %p107 = por %p105, %p106
      %p108 = scmp.ne.s32.totalorder %s97, %s98
      %p109 = scmp.eq.s32.totalorder %s19, 0
      %p110 = por %p108, %p109
      %p111 = scmp.ne.s32.totalorder %s97, %s98
      %p112 = scmp.eq.s32.totalorder %s20, 1
      %p113 = por %p111, %p112
      %p115 = scmp.ne.s32.totalorder %s98, %s114
      %p116 = scmp.eq.s32.totalorder %s20, 0
      %p117 = por %p115, %p116
      %p118 = scmp.le.s32.totalorder 1, %s14
      %p119 = scmp.lt.s32.totalorder %s14, 3
      %p120 = pnand %p118, %p119
      %p121 = pneg %p120
      // Predicated region
      $region9: #{tpu_custom_call.1} parent=5 // pred_check
        _
      $region10: #{tpu_custom_call.1} parent=5 // pred_check_branch
        %123 = sbr.rel (%p120) target = $region12
      $region11: #{tpu_custom_call.1} parent=5 // pred_region
        %s124 = ssub.s32 %s14, 1
      $region12: #{tpu_custom_call.1} parent=5 // pred_fallthru
        _
      %p125 = scmp.lt.s32.totalorder %s14, 2
      // Predicated region
      $region13: #{tpu_custom_call.1} parent=5 // pred_check
        %p126 = pneg %p125
      $region14: #{tpu_custom_call.1} parent=5 // pred_check_branch
        %128 = sbr.rel (%p126) target = $region16
      $region15: #{tpu_custom_call.1} parent=5 // pred_region
        // Predicated region
        $region17: #{tpu_custom_call.1} parent=15 // pred_check
          %p129 = pneg %p48
        $region18: #{tpu_custom_call.1} parent=15 // pred_check_branch
          %131 = sbr.rel (%p129) target = $region20
        $region19: #{tpu_custom_call.1} parent=15 // pred_region
          %s132 = sand.u32 %s38, 1
          %s133 = scalar_lea.sflag [#allocation3], %s132
          %s134 = sand.u32 %s38, 1
          %s135 = smul.addr %s134, 8
          %s136 = scalar_lea.vmem [#allocation2], %s135
          %s137 = smul.u32 2, %s22
          %s139 = ssub.s32 128, 128
          %140 = vsyncadd %s133, %s139
          %s141 = smul.addr %s21, 2
          %s142 = sadd.s32 %s137, %s141
          %s143 = smul.addr %s142, 64
          %s144 = scalar_lea.hbm %s0, %s143
          %s146 = sshll.u32 %s136, 4
          %s147 = int_to_ptr.vmem [resolvable:$true] %s146
          %149 = dma.hbm_to_vmem [thread:$0]  %s144, 128, %s147, %s133
        $region20: #{tpu_custom_call.1} parent=15 // pred_fallthru
          _
        // Predicated region
        $region21: #{tpu_custom_call.1} parent=15 // pred_check
          %p150 = pneg %p76
        $region22: #{tpu_custom_call.1} parent=15 // pred_check_branch
          %152 = sbr.rel (%p150) target = $region24
        $region23: #{tpu_custom_call.1} parent=15 // pred_region
          %s153 = sand.u32 %s66, 1
          %s154 = scalar_lea.sflag [#allocation5], %s153
          %s155 = sand.u32 %s66, 1
          %s156 = smul.addr %s155, 2
          %s157 = scalar_lea.vmem [#allocation4], %s156
          %s158 = smul.u32 2, %s22
          %s160 = ssub.s32 32, 32
          %161 = vsyncadd %s154, %s160
          %s162 = smul.addr %s21, 2
          %s163 = sadd.s32 %s158, %s162
          %s164 = smul.addr %s163, 16
          %s165 = scalar_lea.hbm %s1, %s164
          %s167 = sshll.u32 %s157, 4
          %s168 = int_to_ptr.vmem [resolvable:$true] %s167
          %170 = dma.hbm_to_vmem [thread:$0]  %s165, 32, %s168, %s154
        $region24: #{tpu_custom_call.1} parent=15 // pred_fallthru
          _
      $region16: #{tpu_custom_call.1} parent=5 // pred_fallthru
        _
      %p171 = scmp.le.s32.totalorder 1, %s14
      %p172 = scmp.lt.s32.totalorder %s14, 3
      %p173 = pnand %p171, %p172
      %p174 = pneg %p173
      // Predicated region
      $region25: #{tpu_custom_call.1} parent=5 // pred_check
        _
      $region26: #{tpu_custom_call.1} parent=5 // pred_check_branch
        %176 = sbr.rel (%p173) target = $region28
      $region27: #{tpu_custom_call.1} parent=5 // pred_region
        %s177 = ssub.s32 %s14, 1
        %s178 = sand.u32 %s41, 1
        %s179 = scalar_lea.sflag [#allocation3], %s178
        %s180 = sand.u32 %s41, 1
        %s181 = smul.addr %s180, 8
        %s182 = scalar_lea.vmem [#allocation2], %s181
        // Predicated region
        $region29: #{tpu_custom_call.1} parent=27 // pred_check
          %p183 = pneg %p54
        $region30: #{tpu_custom_call.1} parent=27 // pred_check_branch
          %185 = sbr.rel (%p183) target = $region32
        $region31: #{tpu_custom_call.1} parent=27 // pred_region
          %186 = dma.done %s179, 128
        $region32: #{tpu_custom_call.1} parent=27 // pred_fallthru
          _
        %s187 = sand.u32 %s69, 1
        %s188 = scalar_lea.sflag [#allocation5], %s187
        %s189 = sand.u32 %s69, 1
        %s190 = smul.addr %s189, 2
        %s191 = scalar_lea.vmem [#allocation4], %s190
        // Predicated region
        $region33: #{tpu_custom_call.1} parent=27 // pred_check
          %p192 = pneg %p82
        $region34: #{tpu_custom_call.1} parent=27 // pred_check_branch
          %194 = sbr.rel (%p192) target = $region36
        $region35: #{tpu_custom_call.1} parent=27 // pred_region
          %195 = dma.done %s188, 32
        $region36: #{tpu_custom_call.1} parent=27 // pred_fallthru
          _
        %s196 = sand.u32 %s41, 1
        %s197 = scalar_lea.sflag [#allocation3], %s196
        %s198 = sand.u32 %s41, 1
        %s199 = smul.addr %s198, 8
        %s200 = scalar_lea.vmem [#allocation2], %s199
        %p201 = pneg %p54
        %p202 = pneg %p51
        %s203 = sand.u32 %s69, 1
        %s204 = scalar_lea.sflag [#allocation5], %s203
        %s205 = sand.u32 %s69, 1
        %s206 = smul.addr %s205, 2
        %s207 = scalar_lea.vmem [#allocation4], %s206
        %p208 = pneg %p82
        %p209 = pneg %p79
        %p210 = pneg %p110
        %p211 = pneg %p107
        %p212 = scmp.lt.s32.totalorder %s23, 1
        %s213 = scalar_select %p212, %s23, 1
        %p214 = scmp.lt.s32.totalorder %s24, 0
        %s215 = scalar_select %p214, %s24, 0
        %s216 = sadd.s32 %s215, %s213
        %s217 = smul.addr %s216, 4
        %s218 = scalar_lea.vmem %s2, %s217
        %s219 = smul.u32 2, %s24
        %s220 = smul.u32 2, %s24
        %p221 = scmp.lt.s32.totalorder %s23, 1
        %s222 = scalar_select %p221, %s23, 1
        %p223 = scmp.lt.s32.totalorder %s24, 0
        %s224 = scalar_select %p223, %s24, 0
        %s225 = sadd.s32 %s224, %s222
        %s226 = smul.addr %s225, 4
        %s227 = scalar_lea.vmem %s2, %s226
        %v228 = vld [vmem:[%s182] sm:$0xff]
        %v229 = vld [vmem:[%s191] sm:$0x3]
        %v230 = vlaneseq
        %v231 = vshrl.u32 %v230, 7
        %v232 = vlaneseq
        %v233 = vshrl.u32 %v232, 7
        %v234 = vsub.s32 0, %v233
        %v235 = vrot.slane %v229, %v234
        %v236 = vlaneseq
        %v237 = vshrl.u32 %v236, 7
        %v238 = vsub.s32 1, %v237
        %v239 = vrot.slane %v229, %v238
        %vm240 = vcmp.eq.s32.totalorder %v231, %v235
        %vm241 = vcmp.eq.s32.totalorder %v231, %v239
        %v242 = vsel %vm240, 1, 0
        %v243 = vsel %vm241, 1, 0
        %v244 = vcvt.s32.f32 %v242
        %v245 = vcvt.s32.f32 %v243
        %v248 = vcombine.low %v244, %v245
        %v250 = vmul.f32 %v228, %v248
        %v252 = vcombine.high %v250, %v250
        %vm254 = vcmask 1043456
        %v255 = vsel %vm254, %v250, 0.0
        %v256 = vsel %vm254, %v252, 0.0
        %v257 = vadd.f32 %v255, %v256
        %258 = vadd.xlane.f32.xlu0 %v257
        %v259 = vpop.xlane.xlu0 %258
        %v260 = vsub.f32 %v228, %v248
        %v261 = vmul.f32 %v260, %v260
        %v263 = vcombine.high %v261, %v261
        %v265 = vsel %vm254, %v261, 0.0
        %v266 = vsel %vm254, %v263, 0.0
        %v267 = vadd.f32 %v265, %v266
        %268 = vadd.xlane.f32.xlu0 %v267
        %v269 = vpop.xlane.xlu0 %268
        %vm270 = vcmask 3072
        %271 = vst.msk [vmem:[%s227] sm:$0xf] %vm270, %v259
        %vm272 = vcmask 11272
        %273 = vst.msk [vmem:[%s227] sm:$0xf] %vm272, %v269
        %p274 = scmp.lt.s32.totalorder %s23, 1
        %s275 = scalar_select %p274, %s23, 1
        %p276 = scmp.lt.s32.totalorder %s24, 0
        %s277 = scalar_select %p276, %s24, 0
        %s278 = sadd.s32 %s277, %s275
        %s279 = smul.addr %s278, 4
        %s280 = scalar_lea.vmem %s2, %s279
        // Predicated region
        $region37: #{tpu_custom_call.1} parent=27 // pred_check
          %p281 = pneg %p107
        $region38: #{tpu_custom_call.1} parent=27 // pred_check_branch
          %283 = sbr.rel (%p281) target = $region40
        $region39: #{tpu_custom_call.1} parent=27 // pred_region
          _
        $region40: #{tpu_custom_call.1} parent=27 // pred_fallthru
          _
      $region28: #{tpu_custom_call.1} parent=5 // pred_fallthru
        _
      %p284 = scmp.le.s32.totalorder 2, %s14
      // Predicated region
      $region41: #{tpu_custom_call.1} parent=5 // pred_check
        %p285 = pneg %p284
      $region42: #{tpu_custom_call.1} parent=5 // pred_check_branch
        %287 = sbr.rel (%p285) target = $region44
      $region43: #{tpu_custom_call.1} parent=5 // pred_region
        %s288 = ssub.s32 %s14, 2
        // Predicated region
        $region45: #{tpu_custom_call.1} parent=43 // pred_check
          %p289 = pneg %p113
        $region46: #{tpu_custom_call.1} parent=43 // pred_check_branch
          %291 = sbr.rel (%p289) target = $region48
        $region47: #{tpu_custom_call.1} parent=43 // pred_region
          %p292 = scmp.lt.s32.totalorder %s25, 1
          %s293 = scalar_select %p292, %s25, 1
          %p294 = scmp.lt.s32.totalorder %s26, 0
          %s295 = scalar_select %p294, %s26, 0
          %s296 = sadd.s32 %s295, %s293
          %s297 = smul.addr %s296, 4
          %s298 = scalar_lea.vmem %s2, %s297
        $region48: #{tpu_custom_call.1} parent=43 // pred_fallthru
          _
      $region44: #{tpu_custom_call.1} parent=5 // pred_fallthru
        _
    $region6: #{tpu_custom_call.1} parent=1 // loop_footer
      %s18 = sadd.s32 1, %s14
    $region7: #{tpu_custom_call.1} parent=1 // loop_footer_branch
      %13 = sbr.rel target = $region3
    $region8: #{tpu_custom_call.1} parent=1 // loop_exit
      _
    %299 = vsyncpa [#allocation3], 1
    %s300 = scalar_lea.sflag [#allocation3], 1
    %301 = vsyncpa %s300, 1
    %302 = vsyncpa [#allocation5], 1
    %s303 = scalar_lea.sflag [#allocation5], 1
    %304 = vsyncpa %s303, 1

</llo_original>
